<compile_context>
chip_gen: v7x
topology: tpu7x:2x2x1
jax: 0.10.0
libtpu: 0.0.40
codegen_flags: <defaults>
</compile_context>

<pallas_src>
import math

import jax
import jax.numpy as jnp
from jax.experimental import pallas as pl
from jax.experimental.pallas import tpu as pltpu


def _round_up(x, m):
    return ((x + m - 1) // m) * m


def _vmem_budget_bytes():
    """~75% of per-core VMEM (v5e/v6e: 128 MiB, v7x: 64 MiB), safe fallback."""
    try:
        cap = int(pltpu.get_tpu_info().vmem_capacity_bytes)
    except Exception:
        cap = 64 * 1024 * 1024          # conservative (v7x per-TensorCore)
    return max(16 * 1024 * 1024, (cap * 3) // 4)


def _pick_tile(total, max_tile, prefer_multi=False):
    """Largest multiple of 128 that divides `total` (itself a multiple of 128)
    and is <= max_tile.  With prefer_multi, try to leave >= 2 tiles so the
    "parallel" grid axis can shard across TensorCores."""
    cap = min(max_tile, total)
    if prefer_multi and total >= 256:
        cap = min(cap, total // 2)
    best = 128
    t = 128
    while t <= cap:
        if total % t == 0:
            best = t
        t += 128
    return best


# --------------------- Stage 1: support = X @ W ---------------------
def _xw_kernel(x_ref, w_ref, s_ref):
    s_ref[...] = jnp.dot(
        x_ref[...], w_ref[...], preferred_element_type=jnp.float32
    ).astype(s_ref.dtype)


# ------------- Stage 2: out = adj @ support (+ bias) ----------------
def _make_stage2_kernel(has_bias, use_scratch, resident_support, tk, compute_dtype):
    """(tm, tk)-tiled adj @ support with f32 accumulation over the k axis."""

    def kernel(*refs):
        it = iter(refs)
        adj_ref = next(it)
        s_ref = next(it)
        b_ref = next(it) if has_bias else None
        o_ref = next(it)
        acc_ref = next(it) if use_scratch else o_ref   # f32 out: accumulate in place

        k = pl.program_id(1)

        @pl.when(k == 0)
        def _init():
            acc_ref[...] = jnp.zeros_like(acc_ref)

        a = adj_ref[...]
        if a.dtype != compute_dtype:        # adj stays un-copied (f32) in HBM;
            a = a.astype(compute_dtype)     # cast each block on the VPU instead.
        if resident_support:                # support fully VMEM-resident
            row0 = pl.multiple_of(k * tk, 128)
            s = s_ref[pl.ds(row0, tk), :]
        else:                               # streamed (tk, F_out) slice
            s = s_ref[...]

        acc_ref[...] += jnp.dot(a, s, preferred_element_type=jnp.float32)

        if has_bias or use_scratch:
            @pl.when(k == pl.num_programs(1) - 1)
            def _finalize():
                val = acc_ref[...]
                if has_bias:
                    val = val + b_ref[...]
                o_ref[...] = val.astype(o_ref.dtype)

    return kernel


def graph_convolution(x, adj, weight, bias=None, *,
                      compute_dtype=jnp.bfloat16, tm=512, tk=1024):
    """GCN layer forward: adj @ (x @ weight) (+ bias).

    x:      [N, F_in]  float32
    adj:    [N, N]     dense adjacency (f32, or already in compute_dtype)
    weight: [F_in, F_out]
    bias:   [F_out] or None
    compute_dtype: MXU input dtype (bf16 recommended on v6e/v7x; f32 is exact).
    """
    n, f_in = x.shape
    f_out = weight.shape[1]
    assert weight.shape[0] == f_in and adj.shape == (n, n)

    out_dtype = jnp.dtype(x.dtype)
    cd = jnp.dtype(compute_dtype)
    budget = _vmem_budget_bytes()

    # ---- lane-granular (128) padded shapes; tiles will divide them exactly ----
    f_in_p = _round_up(f_in, 128)
    f_out_p = _round_up(f_out, 128)
    n_p = _round_up(n, 128)

    # ---- adjacency: avoid a second N^2 HBM copy whenever possible ----
    if n_p == n:
        adj_in = adj                     # stream as-is; cast per block in kernel
    else:
        # padding forces one copy anyway; fold the compute-dtype cast into it
        adj_in = jnp.pad(adj, ((0, n_p - n), (0, n_p - n))).astype(cd)
    adj_itemsize = jnp.dtype(adj_in.dtype).itemsize

    # x / weight are tiny relative to adj; pad + cast in the wrapper is fine.
    x_p = jnp.pad(x, ((0, n_p - n), (0, f_in_p - f_in))).astype(cd)
    w_p = jnp.pad(weight, ((0, f_in_p - f_in), (0, f_out_p - f_out))).astype(cd)

    # ---- stage 1: support = X @ W (row tiled; f_out tiled only if the weight
    #      would otherwise blow the VMEM budget) ----
    tms = _pick_tile(n_p, tm, prefer_multi=True)
    tns = f_out_p
    while (2 * (tms * f_in_p + f_in_p * tns + tms * tns) * cd.itemsize > budget
           and (tns > 128 or tms > 128)):
        if tns > 128:
            tns = _pick_tile(f_out_p, tns - 128)
        else:
            tms = _pick_tile(n_p, tms - 128)
    # TODO(synk): also tile the f_in contraction for extremely wide input layers.

    support = pl.pallas_call(
        _xw_kernel,
        out_shape=jax.ShapeDtypeStruct((n_p, f_out_p), cd),
        grid_spec=pltpu.PrefetchScalarGridSpec(
            num_scalar_prefetch=0,
            grid=(n_p // tms, f_out_p // tns),
            in_specs=[
                pl.BlockSpec((tms, f_in_p), lambda i, j: (i, 0)),
                pl.BlockSpec((f_in_p, tns), lambda i, j: (0, j)),
            ],
            out_specs=pl.BlockSpec((tms, tns), lambda i, j: (i, j)),
        ),
        compiler_params=pltpu.CompilerParams(
            dimension_semantics=("parallel", "parallel"),
            vmem_limit_bytes=budget,
        ),
    )(x_p, w_p)

    # ---- stage 2: out = adj @ support (+ bias) ----
    tm_ = _pick_tile(n_p, tm, prefer_multi=True)
    tk_ = _pick_tile(n_p, tk)
    out_itemsize = out_dtype.itemsize

    def _s2_bytes(tm_v, tk_v, resident):
        b = 2 * tm_v * tk_v * adj_itemsize                    # adj (double buffered)
        b += (2 * n_p * f_out_p * cd.itemsize if resident     # resident support
              else 2 * tk_v * f_out_p * cd.itemsize)          # streamed support
        b += 2 * tm_v * f_out_p * out_itemsize                # output tile
        b += tm_v * f_out_p * 4                               # f32 accumulator (worst case)
        b += 8 * f_out_p * 4                                  # bias row
        return b

    # shrink tiles until at least the streamed-support plan fits the budget
    while _s2_bytes(tm_, tk_, False) > budget and (tk_ > 128 or tm_ > 128):
        if tk_ > 128:
            tk_ = _pick_tile(n_p, tk_ - 128)
        else:
            tm_ = _pick_tile(n_p, tm_ - 128)
    resident = _s2_bytes(tm_, tk_, True) <= budget

    use_scratch = out_dtype != jnp.float32
    has_bias = bias is not None

    in_specs = [
        pl.BlockSpec((tm_, tk_), lambda i, k: (i, k)),
        (pl.BlockSpec((n_p, f_out_p), lambda i, k: (0, 0)) if resident
         else pl.BlockSpec((tk_, f_out_p), lambda i, k: (k, 0))),
    ]
    args = [adj_in, support]
    if has_bias:
        in_specs.append(pl.BlockSpec((1, f_out_p), lambda i, k: (0, 0)))
        args.append(jnp.pad(bias.astype(jnp.float32),
                            (0, f_out_p - f_out)).reshape(1, f_out_p))

    kernel = _make_stage2_kernel(has_bias, use_scratch, resident, tk_, cd)
    out_p = pl.pallas_call(
        kernel,
        out_shape=jax.ShapeDtypeStruct((n_p, f_out_p), out_dtype),
        grid_spec=pltpu.PrefetchScalarGridSpec(
            num_scalar_prefetch=0,
            grid=(n_p // tm_, n_p // tk_),
            in_specs=in_specs,
            out_specs=pl.BlockSpec((tm_, f_out_p), lambda i, k: (i, 0)),
            scratch_shapes=([pltpu.VMEM((tm_, f_out_p), jnp.float32)]
                            if use_scratch else []),
        ),
        compiler_params=pltpu.CompilerParams(
            dimension_semantics=("parallel", "arbitrary"),
            vmem_limit_bytes=budget,
        ),
    )(*args)

    return out_p[:n, :f_out]


def init_gcn_params(key, in_features, out_features, bias=True):
    """Deterministic xavier-normal init (gain=0.02), matching reset_parameters_xavier."""
    std = 0.02 * math.sqrt(2.0 / (in_features + out_features))
    w = std * jax.random.normal(key, (in_features, out_features), dtype=jnp.float32)
    b = jnp.zeros((out_features,), dtype=jnp.float32) if bias else None
    return w, b


def _make_inputs(key, n, f_in, f_out, with_bias=True):
    k_x, k_adj, k_w = jax.random.split(key, 3)
    x = jax.random.normal(k_x, (n, f_in), dtype=jnp.float32)
    a_raw = (jax.random.uniform(k_adj, (n, n)) > 0.5).astype(jnp.float32)
    a_sym = jnp.maximum(a_raw, a_raw.T) + jnp.eye(n, dtype=jnp.float32)
    adj = a_sym / jnp.sum(a_sym, axis=1, keepdims=True)
    weight, bias = init_gcn_params(k_w, f_in, f_out, bias=with_bias)
    return x, adj, weight, bias


if __name__ == "__main__":
    key = jax.random.PRNGKey(0)

    # ---- small case (module-sized): N=8 nodes, 16 -> 32 features ----
    N, F_IN, F_OUT = 8, 16, 32
    x, adj, weight, bias = _make_inputs(key, N, F_IN, F_OUT, with_bias=True)
    ref = adj @ (x @ weight) + bias[None, :]

    # exact-precision path (f32 through the MXU, f32 accumulation)
    out_f32 = jax.block_until_ready(
        graph_convolution(x, adj, weight, bias, compute_dtype=jnp.float32))
    assert out_f32.shape == (N, F_OUT)
    assert jnp.allclose(out_f32, ref, atol=1e-5, rtol=1e-5), "f32 mismatch"

    # fast path: bf16 MXU inputs, f32 accumulation
    out_bf16 = jax.block_until_ready(graph_convolution(x, adj, weight, bias))
    assert out_bf16.shape == (N, F_OUT)
    assert jnp.allclose(out_bf16, ref, atol=2e-3, rtol=2e-2), "bf16 mismatch"

    # no-bias, f32-output path (no bias arg, no scratch, in-place accumulation)
    out_nb = jax.block_until_ready(
        graph_convolution(x, adj, weight, None, compute_dtype=jnp.float32))
    assert jnp.allclose(out_nb, adj @ (x @ weight), atol=1e-5, rtol=1e-5), \
        "no-bias mismatch"

    # ---- lane-aligned N: exercises the zero-copy adjacency path (f32 adj
    #      streamed from HBM, cast to bf16 per block inside the kernel) ----
    key3 = jax.random.PRNGKey(2)
    N3, F_IN3, F_OUT3 = 128, 64, 32
    x3, adj3, w3, b3 = _make_inputs(key3, N3, F_IN3, F_OUT3, with_bias=True)
    ref3 = adj3 @ (x3 @ w3) + b3[None, :]
    out3 = jax.block_until_ready(graph_convolution(x3, adj3, w3, b3))
    assert out3.shape == (N3, F_OUT3)
    assert jnp.allclose(out3, ref3, atol=2e-3, rtol=2e-2), "zero-copy adj mismatch"

    # ---- awkward N: exercises 128-granular padding (520 -> 640, not 768x1024)
    #      and the multi-tile (rows x contraction) grid with resident support ----
    key2 = jax.random.PRNGKey(1)
    N2, F_IN2, F_OUT2 = 520, 48, 96
    x2, adj2, w2, b2 = _make_inputs(key2, N2, F_IN2, F_OUT2, with_bias=True)
    ref2 = adj2 @ (x2 @ w2) + b2[None, :]
    out2 = jax.block_until_ready(
        graph_convolution(x2, adj2, w2, b2, compute_dtype=jnp.float32))
    assert out2.shape == (N2, F_OUT2)
    assert jnp.allclose(out2, ref2, atol=1e-5, rtol=1e-4), "tiled-grid mismatch"

    print("KERNEL_OK")
</pallas_src>

<mosaic_0001>
module attributes {stable_mosaic.version = 11 : i64} {
  func.func @_xw_kernel(%arg0: i32, %arg1: i32, %arg2: memref<128x128xf32, #tpu.memory_space<vmem>>, %arg3: memref<128x128xf32, #tpu.memory_space<vmem>>, %arg4: memref<128x128xf32, #tpu.memory_space<vmem>>) attributes {dimension_semantics = [#tpu.dimension_semantics<parallel>, #tpu.dimension_semantics<parallel>], iteration_bounds = array<i64: 1, 1>, scalar_prefetch = 0 : i64, scratch_operands = 0 : i64, tpu.core_type = #tpu.core_type<tc>, window_params = [{transform_indices = @transform_0, window_bounds = array<i64: 128, 128>}, {transform_indices = @transform_1, window_bounds = array<i64: 128, 128>}, {transform_indices = @transform_2, window_bounds = array<i64: 128, 128>}]} {
    %c0 = arith.constant 0 : index
    %c0_0 = arith.constant 0 : index
    %0 = vector.load %arg2[%c0, %c0_0] : memref<128x128xf32, #tpu.memory_space<vmem>>, vector<128x128xf32>
    %c0_1 = arith.constant 0 : index
    %c0_2 = arith.constant 0 : index
    %1 = vector.load %arg3[%c0_1, %c0_2] : memref<128x128xf32, #tpu.memory_space<vmem>>, vector<128x128xf32>
    %cst = arith.constant dense<0.000000e+00> : vector<128x128xf32>
    %2 = tpu.matmul %0, %1, %cst {dimension_numbers = #tpu.dot_dimension_numbers<[1], [0], [0], [1], [0, 0, 1, 1], [], []>} : vector<128x128xf32>, vector<128x128xf32>, vector<128x128xf32> -> vector<128x128xf32>
    %c0_3 = arith.constant 0 : index
    %c0_4 = arith.constant 0 : index
    %3 = vector.load %arg4[%c0_3, %c0_4] : memref<128x128xf32, #tpu.memory_space<vmem>>, vector<128x128xf32>
    tpu.vector_store %arg4[%c0_3, %c0_4], %2 {strides = array<i32>} : memref<128x128xf32, #tpu.memory_space<vmem>>, vector<128x128xf32>,
    return
  }
  func.func @transform_0(%arg0: i32, %arg1: i32) -> (i32, i32) {
    %c0_i32 = arith.constant 0 : i32
    %c0_i32_0 = arith.constant 0 : i32
    return %arg0, %c0_i32 : i32, i32
  }
  func.func @transform_1(%arg0: i32, %arg1: i32) -> (i32, i32) {
    %c0_i32 = arith.constant 0 : i32
    %c0_i32_0 = arith.constant 0 : i32
    return %c0_i32, %arg1 : i32, i32
  }
  func.func @transform_2(%arg0: i32, %arg1: i32) -> (i32, i32) {
    %c0_i32 = arith.constant 0 : i32
    return %arg0, %arg1 : i32, i32
  }
}

</mosaic_0001>

<llo_original>
// kernel: tpu_custom_call.1
$region0: #{tpu_custom_call.1}
  #allocation0 [shape = 'u32[]', space=smem, size = 0x4, offset = 0x4, fixed_abs, tag = 'smem constant byte address 0x4 - core index']
  #allocation1 [shape = 'u32[144,128]{1,0:T(1,128)}', space=vmem, size = 0x12000, scoped, tag = 'internal scratch']
  %s0 = inlined_call_operand.hbm [shape: f32[128,128], index: 0, kind: input, shape index: {}]
  %s1 = inlined_call_operand.hbm [shape: f32[128,128], index: 1, kind: input, shape index: {}]
  %s2 = inlined_call_operand.hbm [shape: f32[128,128], index: 2, kind: output, shape index: {}]
  %s3 = sld [smem:[#allocation0]]
  $region26: #{tpu_custom_call.1} parent=0
    _
  %s5 = ssub.s32 1, %s3
  %s6 = scalar_select 0, %s5, %s3
  $region1: #{tpu_custom_call.1} parent=0
    #allocation2 [shape = 'u8[65536]{0}', space=vmem, size = 0x10000, scoped, tag = 'input window, operand 0, single buffered']
    #allocation3 [shape = 's32[1]{0}', space=sflag, size = 0x4, scoped, tag = 'scoped memory for tpu_custom_call.1']
    #allocation4 [shape = 's32[1]{0}', space=sflag, size = 0x4, scoped, tag = 'scoped memory for tpu_custom_call.1']
    #allocation5 [shape = 'u8[65536]{0}', space=vmem, size = 0x10000, scoped, tag = 'input window, operand 1, single buffered']
    #allocation6 [shape = 's32[1]{0}', space=sflag, size = 0x4, scoped, tag = 'scoped memory for tpu_custom_call.1']
    #allocation7 [shape = 'u8[65536]{0}', space=vmem, size = 0x10000, scoped, tag = 'output window, operand 0, single buffered']
    %7 = vsyncpa [#allocation3], 0
    %8 = vsyncpa [#allocation6], 0
    %9 = vsyncpa [#allocation4], 0
    // Predicated region
    $region2: #{tpu_custom_call.1} parent=1 // pred_check
      _
    $region3: #{tpu_custom_call.1} parent=1 // pred_check_branch
      %11 = sbr.rel (0) target = $region5
    $region4: #{tpu_custom_call.1} parent=1 // pred_region
      %s13 = ssub.s32 2048, 2048
      %14 = vsyncadd [#allocation3], %s13
      %s15 = sshll.u32 [#allocation2], 4
      %s16 = int_to_ptr.vmem [resolvable:$true] %s15
      %21 = dma.hbm_to_vmem [thread:$0]  %s0, 2048, %s16, [#allocation3], 128, 128, 8
    $region5: #{tpu_custom_call.1} parent=1 // pred_fallthru
      _
    // Predicated region
    $region6: #{tpu_custom_call.1} parent=1 // pred_check
      _
    $region7: #{tpu_custom_call.1} parent=1 // pred_check_branch
      %23 = sbr.rel (0) target = $region9
    $region8: #{tpu_custom_call.1} parent=1 // pred_region
      %s25 = ssub.s32 2048, 2048
      %26 = vsyncadd [#allocation6], %s25
      %s27 = sshll.u32 [#allocation5], 4
      %s28 = int_to_ptr.vmem [resolvable:$true] %s27
      %33 = dma.hbm_to_vmem [thread:$0]  %s1, 2048, %s28, [#allocation6], 128, 128, 8
    $region9: #{tpu_custom_call.1} parent=1 // pred_fallthru
      _
    // Predicated region
    $region10: #{tpu_custom_call.1} parent=1 // pred_check
      _
    $region11: #{tpu_custom_call.1} parent=1 // pred_check_branch
      %35 = sbr.rel (0) target = $region13
    $region12: #{tpu_custom_call.1} parent=1 // pred_region
      %36 = dma.done [#allocation3], 2048
    $region13: #{tpu_custom_call.1} parent=1 // pred_fallthru
      _
    // Predicated region
    $region14: #{tpu_custom_call.1} parent=1 // pred_check
      _
    $region15: #{tpu_custom_call.1} parent=1 // pred_check_branch
      %38 = sbr.rel (0) target = $region17
    $region16: #{tpu_custom_call.1} parent=1 // pred_region
      %39 = dma.done [#allocation6], 2048
    $region17: #{tpu_custom_call.1} parent=1 // pred_fallthru
      _
    %v40 = vld [vmem:[#allocation2] sm:$0xff]
    %v41 = vld [vmem:[#allocation2 + $0x8] sm:$0xff]
    %v42 = vld [vmem:[#allocation2 + $0x10] sm:$0xff]
    %v43 = vld [vmem:[#allocation2 + $0x18] sm:$0xff]
    %v44 = vld [vmem:[#allocation2 + $0x20] sm:$0xff]
    %v45 = vld [vmem:[#allocation2 + $0x28] sm:$0xff]
    %v46 = vld [vmem:[#allocation2 + $0x30] sm:$0xff]
    %v47 = vld [vmem:[#allocation2 + $0x38] sm:$0xff]
    %v48 = vld [vmem:[#allocation2 + $0x40] sm:$0xff]
    %v49 = vld [vmem:[#allocation2 + $0x48] sm:$0xff]
    %v50 = vld [vmem:[#allocation2 + $0x50] sm:$0xff]
    %v51 = vld [vmem:[#allocation2 + $0x58] sm:$0xff]
    %v52 = vld [vmem:[#allocation2 + $0x60] sm:$0xff]
    %v53 = vld [vmem:[#allocation2 + $0x68] sm:$0xff]
    %v54 = vld [vmem:[#allocation2 + $0x70] sm:$0xff]
    %v55 = vld [vmem:[#allocation2 + $0x78] sm:$0xff]
    %v56 = vld [vmem:[#allocation5] sm:$0xff]
    %v57 = vld [vmem:[#allocation5 + $0x8] sm:$0xff]
    %v58 = vld [vmem:[#allocation5 + $0x10] sm:$0xff]
    %v59 = vld [vmem:[#allocation5 + $0x18] sm:$0xff]
    %v60 = vld [vmem:[#allocation5 + $0x20] sm:$0xff]
    %v61 = vld [vmem:[#allocation5 + $0x28] sm:$0xff]
    %v62 = vld [vmem:[#allocation5 + $0x30] sm:$0xff]
    %v63 = vld [vmem:[#allocation5 + $0x38] sm:$0xff]
    %v64 = vld [vmem:[#allocation5 + $0x40] sm:$0xff]
    %v65 = vld [vmem:[#allocation5 + $0x48] sm:$0xff]
    %v66 = vld [vmem:[#allocation5 + $0x50] sm:$0xff]
    %v67 = vld [vmem:[#allocation5 + $0x58] sm:$0xff]
    %v68 = vld [vmem:[#allocation5 + $0x60] sm:$0xff]
    %v69 = vld [vmem:[#allocation5 + $0x68] sm:$0xff]
    %v70 = vld [vmem:[#allocation5 + $0x70] sm:$0xff]
    %v71 = vld [vmem:[#allocation5 + $0x78] sm:$0xff]
    %72 = vmatprep.subr.mxu0 0.0
    %73 = vmatpush1.msra.mxu0 %v56
    %74 = vmatprep.subr.mxu0 0.0
    %75 = vmatpush1.msra.mxu0 %v57
    %76 = vmatprep.subr.mxu0 0.0
    %77 = vmatpush1.msra.mxu0 %v58
    %78 = vmatprep.subr.mxu0 0.0
    %79 = vmatpush1.msra.mxu0 %v59
    %80 = vmatprep.subr.mxu0 0.0
    %81 = vmatpush1.msra.mxu0 %v60
    %82 = vmatprep.subr.mxu0 0.0
    %83 = vmatpush1.msra.mxu0 %v61
    %84 = vmatprep.subr.mxu0 0.0
    %85 = vmatpush1.msra.mxu0 %v62
    %86 = vmatprep.subr.mxu0 0.0
    %87 = vmatpush1.msra.mxu0 %v63
    %88 = vmatprep.subr.mxu0 0.0
    %89 = vmatpush1.msra.mxu0 %v64
    %90 = vmatprep.subr.mxu0 0.0
    %91 = vmatpush1.msra.mxu0 %v65
    %92 = vmatprep.subr.mxu0 0.0
    %93 = vmatpush1.msra.mxu0 %v66
    %94 = vmatprep.subr.mxu0 0.0
    %95 = vmatpush1.msra.mxu0 %v67
    %96 = vmatprep.subr.mxu0 0.0
    %97 = vmatpush1.msra.mxu0 %v68
    %98 = vmatprep.subr.mxu0 0.0
    %99 = vmatpush1.msra.mxu0 %v69
    %100 = vmatprep.subr.mxu0 0.0
    %101 = vmatpush1.msra.mxu0 %v70
    %102 = vmatprep.subr.mxu0 0.0
    %103 = vmatpush1.msra.mxu0 %v71
    %104 = vmatprep.subr.mxu0 0.0
    %105 = vmatpush1.msra.mxu0 0.0
    %106 = vmatprep.subr.mxu0 0.0
    %107 = vmatpush1.msra.mxu0 0.0
    %108 = vmatprep.subr.mxu0 0.0
    %109 = vmatpush1.msra.mxu0 0.0
    %110 = vmatprep.subr.mxu0 0.0
    %111 = vmatpush1.msra.mxu0 0.0
    %112 = vmatprep.subr.mxu0 0.0
    %113 = vmatpush1.msra.mxu0 0.0
    %114 = vmatprep.subr.mxu0 0.0
    %115 = vmatpush1.msra.mxu0 0.0
    %116 = vmatprep.subr.mxu0 0.0
    %117 = vmatpush1.msra.mxu0 0.0
    %118 = vmatprep.subr.mxu0 0.0
    %119 = vmatpush1.msra.mxu0 0.0
    %120 = vmatprep.subr.mxu0 0.0
    %121 = vmatpush1.msra.mxu0 0.0
    %122 = vmatprep.subr.mxu0 0.0
    %123 = vmatpush1.msra.mxu0 0.0
    %124 = vmatprep.subr.mxu0 0.0
    %125 = vmatpush1.msra.mxu0 0.0
    %126 = vmatprep.subr.mxu0 0.0
    %127 = vmatpush1.msra.mxu0 0.0
    %128 = vmatprep.subr.mxu0 0.0
    %129 = vmatpush1.msra.mxu0 0.0
    %130 = vmatprep.subr.mxu0 0.0
    %131 = vmatpush1.msra.mxu0 0.0
    %132 = vmatprep.subr.mxu0 0.0
    %133 = vmatpush1.msra.mxu0 0.0
    %134 = vmatprep.subr.mxu0 0.0
    %135 = vmatpush1.msra.mxu0 0.0
    %136 = vmatprep.mubr.f32.mxu0 0.0
    %137 = vmatmul.mubr.f32.gmra.mrb[0].mxu0 %v40
    %v138 = vpop.f32.mrb[0].mxu0
    %v139 = vadd.f32 0.0, %v138
    %v140 = vpop.f32.mrb[0].mxu0
    %141 = vmatprep.mubr.f32.mxu0 0.0
    %142 = vmatmul.mubr.f32.gmra.mrb[0].mxu0 %v41
    %v143 = vpop.f32.mrb[0].mxu0
    %v144 = vadd.f32 0.0, %v143
    %v145 = vpop.f32.mrb[0].mxu0
    %146 = vmatprep.mubr.f32.mxu0 0.0
    %147 = vmatmul.mubr.f32.gmra.mrb[0].mxu0 %v42
    %v148 = vpop.f32.mrb[0].mxu0
    %v149 = vadd.f32 0.0, %v148
    %v150 = vpop.f32.mrb[0].mxu0
    %151 = vmatprep.mubr.f32.mxu0 0.0
    %152 = vmatmul.mubr.f32.gmra.mrb[0].mxu0 %v43
    %v153 = vpop.f32.mrb[0].mxu0
    %v154 = vadd.f32 0.0, %v153
    %v155 = vpop.f32.mrb[0].mxu0
    %156 = vmatprep.mubr.f32.mxu0 0.0
    %157 = vmatmul.mubr.f32.gmra.mrb[0].mxu0 %v44
    %v158 = vpop.f32.mrb[0].mxu0
    %v159 = vadd.f32 0.0, %v158
    %v160 = vpop.f32.mrb[0].mxu0
    %161 = vmatprep.mubr.f32.mxu0 0.0
    %162 = vmatmul.mubr.f32.gmra.mrb[0].mxu0 %v45
    %v163 = vpop.f32.mrb[0].mxu0
    %v164 = vadd.f32 0.0, %v163
    %v165 = vpop.f32.mrb[0].mxu0
    %166 = vmatprep.mubr.f32.mxu0 0.0
    %167 = vmatmul.mubr.f32.gmra.mrb[0].mxu0 %v46
    %v168 = vpop.f32.mrb[0].mxu0
    %v169 = vadd.f32 0.0, %v168
    %v170 = vpop.f32.mrb[0].mxu0
    %171 = vmatprep.mubr.f32.mxu0 0.0
    %172 = vmatmul.mubr.f32.gmra.mrb[0].mxu0 %v47
    %v173 = vpop.f32.mrb[0].mxu0
    %v174 = vadd.f32 0.0, %v173
    %v175 = vpop.f32.mrb[0].mxu0
    %176 = vmatprep.mubr.f32.mxu0 0.0
    %177 = vmatmul.mubr.f32.gmra.mrb[0].mxu0 %v48
    %v178 = vpop.f32.mrb[0].mxu0
    %v179 = vadd.f32 0.0, %v178
    %v180 = vpop.f32.mrb[0].mxu0
    %181 = vmatprep.mubr.f32.mxu0 0.0
    %182 = vmatmul.mubr.f32.gmra.mrb[0].mxu0 %v49
    %v183 = vpop.f32.mrb[0].mxu0
    %v184 = vadd.f32 0.0, %v183
    %v185 = vpop.f32.mrb[0].mxu0
    %186 = vmatprep.mubr.f32.mxu0 0.0
    %187 = vmatmul.mubr.f32.gmra.mrb[0].mxu0 %v50
    %v188 = vpop.f32.mrb[0].mxu0
    %v189 = vadd.f32 0.0, %v188
    %v190 = vpop.f32.mrb[0].mxu0
    %191 = vmatprep.mubr.f32.mxu0 0.0
    %192 = vmatmul.mubr.f32.gmra.mrb[0].mxu0 %v51
    %v193 = vpop.f32.mrb[0].mxu0
    %v194 = vadd.f32 0.0, %v193
    %v195 = vpop.f32.mrb[0].mxu0
    %196 = vmatprep.mubr.f32.mxu0 0.0
    %197 = vmatmul.mubr.f32.gmra.mrb[0].mxu0 %v52
    %v198 = vpop.f32.mrb[0].mxu0
    %v199 = vadd.f32 0.0, %v198
    %v200 = vpop.f32.mrb[0].mxu0
    %201 = vmatprep.mubr.f32.mxu0 0.0
    %202 = vmatmul.mubr.f32.gmra.mrb[0].mxu0 %v53
    %v203 = vpop.f32.mrb[0].mxu0
    %v204 = vadd.f32 0.0, %v203
    %v205 = vpop.f32.mrb[0].mxu0
    %206 = vmatprep.mubr.f32.mxu0 0.0
    %207 = vmatmul.mubr.f32.gmra.mrb[0].mxu0 %v54
    %v208 = vpop.f32.mrb[0].mxu0
    %v209 = vadd.f32 0.0, %v208
    %v210 = vpop.f32.mrb[0].mxu0
    %211 = vmatprep.mubr.f32.mxu0 0.0
    %212 = vmatmul.mubr.f32.gmra.mrb[0].mxu0 %v55
    %v213 = vpop.f32.mrb[0].mxu0
    %v214 = vadd.f32 0.0, %v213
    %v215 = vpop.f32.mrb[0].mxu0
    %216 = vdwg.mxu0
    %217 = vst [vmem:[#allocation7] sm:$0xff] %v139
    %218 = vst [vmem:[#allocation7 + $0x8] sm:$0xff] %v144
    %219 = vst [vmem:[#allocation7 + $0x10] sm:$0xff] %v149
    %220 = vst [vmem:[#allocation7 + $0x18] sm:$0xff] %v154
    %221 = vst [vmem:[#allocation7 + $0x20] sm:$0xff] %v159
    %222 = vst [vmem:[#allocation7 + $0x28] sm:$0xff] %v164
    %223 = vst [vmem:[#allocation7 + $0x30] sm:$0xff] %v169
    %224 = vst [vmem:[#allocation7 + $0x38] sm:$0xff] %v174
    %225 = vst [vmem:[#allocation7 + $0x40] sm:$0xff] %v179
    %226 = vst [vmem:[#allocation7 + $0x48] sm:$0xff] %v184
    %227 = vst [vmem:[#allocation7 + $0x50] sm:$0xff] %v189
    %228 = vst [vmem:[#allocation7 + $0x58] sm:$0xff] %v194
    %229 = vst [vmem:[#allocation7 + $0x60] sm:$0xff] %v199
    %230 = vst [vmem:[#allocation7 + $0x68] sm:$0xff] %v204
    %231 = vst [vmem:[#allocation7 + $0x70] sm:$0xff] %v209
    %232 = vst [vmem:[#allocation7 + $0x78] sm:$0xff] %v214
    // Predicated region
    $region18: #{tpu_custom_call.1} parent=1 // pred_check
      _
    $region19: #{tpu_custom_call.1} parent=1 // pred_check_branch
      %234 = sbr.rel (0) target = $region21
    $region20: #{tpu_custom_call.1} parent=1 // pred_region
      %s236 = ssub.s32 2048, 2048
      %237 = vsyncadd [#allocation4], %s236
      %s238 = sshll.u32 [#allocation7], 4
      %s239 = int_to_ptr.vmem [resolvable:$true] %s238
      %244 = dma.vmem_to_hbm [thread:$0]  %s239, 2048, %s2, [#allocation4], 128, 128, 8
    $region21: #{tpu_custom_call.1} parent=1 // pred_fallthru
      _
    // Predicated region
    $region22: #{tpu_custom_call.1} parent=1 // pred_check
      _
    $region23: #{tpu_custom_call.1} parent=1 // pred_check_branch
      %246 = sbr.rel (0) target = $region25
    $region24: #{tpu_custom_call.1} parent=1 // pred_region
      %247 = dma.done [#allocation4], 2048
    $region25: #{tpu_custom_call.1} parent=1 // pred_fallthru
      _
    %248 = vsyncpa [#allocation3], 1
    %249 = vsyncpa [#allocation6], 1
    %250 = vsyncpa [#allocation4], 1

</llo_original>
